<compile_context>
chip_gen: v7x
topology: tpu7x:2x2x1
jax: 0.10.0
libtpu: 0.0.40
codegen_flags: <defaults>
</compile_context>

<pallas_src>
import functools

import jax
import jax.numpy as jnp
from jax.experimental import pallas as pl
from jax.experimental.pallas import tpu as pltpu


# ---------------------------------------------------------------------------
# helpers
# ---------------------------------------------------------------------------
def _round_up(x, m):
    return ((x + m - 1) // m) * m


def _cdiv(a, b):
    return -(-a // b)


def _sublane(dtype):
    # minimum second-to-last tile dim: f32 -> 8, bf16 -> 16, int8/fp8 -> 32
    return max(8, 32 // jnp.dtype(dtype).itemsize)


@functools.lru_cache(maxsize=1)
def _vmem_budget_and_cap():
    """Generation-aware VMEM budget (trace-time query, cached)."""
    try:
        cap = int(pltpu.get_tpu_info().vmem_capacity_bytes)
    except Exception:  # no info available: fall back to v7x-safe numbers
        cap = 64 * 1024 * 1024
    budget = int(cap * 0.75)                       # ~96 MiB v5e/v6e, ~48 MiB v7x
    limit_cap = min(int(cap * 0.875), cap - 8 * 1024 * 1024)
    return budget, limit_cap


def _vmem_limit(need, limit_cap):
    # `need` already counts double-buffers; just add headroom for compiler
    # internal scratch / semaphores (no 2x fudge).
    return int(min(max(int(need * 1.2), 32 * 1024 * 1024), limit_cap))


def _choose_m_tile(m, tm, sub):
    m_pad = _round_up(m, sub)
    tm_eff = min(_round_up(tm, sub), m_pad)
    # For large m ensure >=2 M blocks so the "parallel" M axis can be sharded
    # across v7x's two TensorCores.  For small m this is pure per-grid-step
    # overhead on single-TC v5e/v6e, so keep a single block there.
    if tm_eff >= m_pad and m >= 1024:
        tm_eff = max(sub, _round_up(_cdiv(m, 2), sub))
    return max(sub, tm_eff)


def _balance_grid_m(m, tm_eff, sub):
    # v7x megacore: prefer an even number of M blocks when m is large so
    # neither TensorCore idles on a tail block.  Harmless on v5e/v6e.
    if m < 1024 or tm_eff >= m:
        return tm_eff
    gm = _cdiv(m, tm_eff)
    if gm > 1 and gm % 2 == 1:
        tm2 = max(sub, _round_up(_cdiv(m, gm + 1), sub))
        if _cdiv(m, tm2) % 2 == 0:
            return tm2
    return tm_eff


def _choose_n_tile(out_f, tn):
    if out_f <= tn:
        return out_f                       # single block == full dim (legal)
    # v6e/v7x MXUs are 256x256 -> keep N tiles multiples of 256 when possible.
    if out_f >= 256:
        return max(256, (tn // 256) * 256)
    return max(128, (tn // 128) * 128)


# ---------------------------------------------------------------------------
# kernels
# ---------------------------------------------------------------------------
def _lowrank_fused_kernel(x_ref, w1_ref, b1_ref, w2_ref, b2_ref, o_ref):
    # Both matmuls fused for one (tm, :) row block; h lives in vregs only.
    # NOTE: rows of the ragged last M block are OOB-padded garbage -- they are
    # masked on the output write and never feed a reduction over M.
    h = jnp.dot(x_ref[...], w1_ref[...], preferred_element_type=jnp.float32)
    h = h + b1_ref[...].astype(jnp.float32)
    # Cast h to the weight dtype (matches the PyTorch Linear->Linear chain and
    # keeps native bf16 MXU rate); accumulate the second matmul in f32.
    y = jnp.dot(h.astype(w2_ref.dtype), w2_ref[...],
                preferred_element_type=jnp.float32)
    o_ref[...] = (y + b2_ref[...].astype(jnp.float32)).astype(o_ref.dtype)


def _lowrank_tiled_kernel(x_ref, w1_ref, b1_ref, w2_ref, b2_ref, o_ref, h_ref):
    # Fallback for out_features too large to hold untiled: N-tiled output with
    # the (tm, rank) activation computed once per M block and reused across N.
    @pl.when(pl.program_id(1) == 0)
    def _():
        h = jnp.dot(x_ref[...], w1_ref[...], preferred_element_type=jnp.float32)
        h_ref[...] = h + b1_ref[...].astype(jnp.float32)

    y = jnp.dot(h_ref[...].astype(w2_ref.dtype), w2_ref[...],
                preferred_element_type=jnp.float32)
    o_ref[...] = (y + b2_ref[...].astype(jnp.float32)).astype(o_ref.dtype)


def _linear_kernel(x_ref, w_ref, b_ref, o_ref):
    y = jnp.dot(x_ref[...], w_ref[...], preferred_element_type=jnp.float32)
    o_ref[...] = (y + b_ref[...].astype(jnp.float32)).astype(o_ref.dtype)


def _linear_k_kernel(x_ref, w_ref, b_ref, o_ref, acc_ref):
    # K (in_features) tiled matmul with an f32 accumulator scratch.
    k = pl.program_id(2)

    @pl.when(k == 0)
    def _():
        acc_ref[...] = jnp.zeros_like(acc_ref)

    acc_ref[...] += jnp.dot(x_ref[...], w_ref[...],
                            preferred_element_type=jnp.float32)

    @pl.when(k == pl.num_programs(2) - 1)
    def _():
        o_ref[...] = (acc_ref[...]
                      + b_ref[...].astype(jnp.float32)).astype(o_ref.dtype)


# ---------------------------------------------------------------------------
# low-rank (two Linear) path
# ---------------------------------------------------------------------------
def _low_rank_matmul(x2, params, tm, tn):
    m, in_f = x2.shape
    w1, b1 = params["w1"], params["b1"].reshape(1, -1)
    w2, b2 = params["w2"], params["b2"].reshape(1, -1)
    rank, out_f = w2.shape
    xsz = x2.dtype.itemsize
    osz = x2.dtype.itemsize
    wsz = w1.dtype.itemsize
    sub = _sublane(x2.dtype)
    budget, limit_cap = _vmem_budget_and_cap()

    # ----- preferred path: out_features untiled, 1-D "parallel" grid over M --
    def need_fused(tm_):
        return (2 * tm_ * in_f * xsz               # x tiles  (double-buffered)
                + 2 * tm_ * out_f * osz            # out tiles (double-buffered)
                + 2 * (in_f + 1) * rank * wsz      # W1 + b1 (constant index map,
                + 2 * (rank + 1) * out_f * wsz)    # W2 + b2;  2 bufs allocated)

    tm_eff = _choose_m_tile(m, tm, sub)
    while need_fused(tm_eff) > budget and tm_eff > sub:
        tm_eff = max(sub, _round_up(tm_eff // 2, sub))

    if need_fused(tm_eff) <= budget:
        tm_eff = _balance_grid_m(m, tm_eff, sub)
        gm = _cdiv(m, tm_eff)
        cost = pl.CostEstimate(
            flops=2 * m * in_f * rank + 2 * m * rank * out_f,
            transcendentals=0,
            bytes_accessed=(m * in_f * xsz + (in_f + 1) * rank * wsz
                            + (rank + 1) * out_f * wsz + m * out_f * osz))
        return pl.pallas_call(
            _lowrank_fused_kernel,
            out_shape=jax.ShapeDtypeStruct((m, out_f), x2.dtype),
            grid_spec=pltpu.PrefetchScalarGridSpec(
                num_scalar_prefetch=0,
                grid=(gm,),
                in_specs=[
                    pl.BlockSpec((tm_eff, in_f), lambda i: (i, 0)),
                    pl.BlockSpec((in_f, rank), lambda i: (0, 0)),
                    pl.BlockSpec((1, rank), lambda i: (0, 0)),
                    pl.BlockSpec((rank, out_f), lambda i: (0, 0)),
                    pl.BlockSpec((1, out_f), lambda i: (0, 0)),
                ],
                out_specs=pl.BlockSpec((tm_eff, out_f), lambda i: (i, 0)),
            ),
            compiler_params=pltpu.CompilerParams(
                dimension_semantics=("parallel",),
                vmem_limit_bytes=_vmem_limit(need_fused(tm_eff), limit_cap)),
            cost_estimate=cost,
        )(x2, w1, b1, w2, b2)

    # ----- fallback: N-tiled output with a resident f32 h scratch ------------
    # TODO(synk): add K (in_features) tiling for layers whose full-width x rows
    # / W1 columns alone exceed the per-generation VMEM budget.
    tm_eff = _choose_m_tile(m, tm, sub)
    tn_eff = _choose_n_tile(out_f, tn)

    def need_tiled(tm_, tn_):
        return (2 * tm_ * in_f * xsz
                + 2 * tm_ * tn_ * osz
                + 2 * (in_f + 1) * rank * wsz
                + 2 * (rank + 1) * tn_ * wsz
                + tm_ * rank * 4)                  # f32 h scratch

    while need_tiled(tm_eff, tn_eff) > budget and tm_eff > sub:
        tm_eff = max(sub, _round_up(tm_eff // 2, sub))
    while need_tiled(tm_eff, tn_eff) > budget and tn_eff > 256:
        tn_eff = max(256, _round_up(tn_eff // 2, 256))
    while need_tiled(tm_eff, tn_eff) > budget and tn_eff > 128:
        tn_eff = max(128, _round_up(tn_eff // 2, 128))

    gm, gn = _cdiv(m, tm_eff), _cdiv(out_f, tn_eff)
    cost = pl.CostEstimate(
        flops=2 * m * in_f * rank + 2 * m * rank * out_f,
        transcendentals=0,
        bytes_accessed=(m * in_f * xsz + (in_f + 1) * rank * wsz
                        + gm * (rank + 1) * out_f * wsz    # W2/b2 re-streamed
                        + m * out_f * osz))
    return pl.pallas_call(
        _lowrank_tiled_kernel,
        out_shape=jax.ShapeDtypeStruct((m, out_f), x2.dtype),
        grid_spec=pltpu.PrefetchScalarGridSpec(
            num_scalar_prefetch=0,
            grid=(gm, gn),
            in_specs=[
                pl.BlockSpec((tm_eff, in_f), lambda i, j: (i, 0)),
                pl.BlockSpec((in_f, rank), lambda i, j: (0, 0)),
                pl.BlockSpec((1, rank), lambda i, j: (0, 0)),
                pl.BlockSpec((rank, tn_eff), lambda i, j: (0, j)),
                pl.BlockSpec((1, tn_eff), lambda i, j: (0, j)),
            ],
            out_specs=pl.BlockSpec((tm_eff, tn_eff), lambda i, j: (i, j)),
            scratch_shapes=[pltpu.VMEM((tm_eff, rank), jnp.float32)],
        ),
        compiler_params=pltpu.CompilerParams(
            # The N axis carries the h scratch -> must stay sequential.
            dimension_semantics=("parallel", "arbitrary"),
            vmem_limit_bytes=_vmem_limit(need_tiled(tm_eff, tn_eff), limit_cap)),
        cost_estimate=cost,
    )(x2, w1, b1, w2, b2)


# ---------------------------------------------------------------------------
# single Linear path
# ---------------------------------------------------------------------------
def _linear_matmul(x2, params, tm, tn, tk):
    m, in_f = x2.shape
    w, b = params["w"], params["b"].reshape(1, -1)
    out_f = w.shape[1]
    xsz = x2.dtype.itemsize
    osz = x2.dtype.itemsize
    wsz = w.dtype.itemsize
    sub = _sublane(x2.dtype)
    budget, limit_cap = _vmem_budget_and_cap()

    tm_eff = _choose_m_tile(m, tm, sub)
    tn_eff = _choose_n_tile(out_f, tn)

    def need_untiled(tm_, tn_):
        return (2 * tm_ * in_f * xsz
                + 2 * tm_ * tn_ * osz
                + 2 * (in_f + 1) * tn_ * wsz)

    # --- decide whether to tile K (in_features) ------------------------------
    tk_eff = None
    if tk is not None:
        if tk < in_f and in_f % tk == 0 and tk % 128 == 0:
            tk_eff = tk
    elif need_untiled(max(sub, min(tm_eff, 256)), tn_eff) > budget:
        # Untiled K would force tm below MXU-friendly sizes (or blow VMEM).
        # Pick the largest K tile that divides in_features evenly so the
        # reduction never accumulates OOB-padded garbage from a ragged K block.
        for cand in (2048, 1024, 512, 256, 128):
            if cand < in_f and in_f % cand == 0:
                tk_eff = cand
                break

    if tk_eff is not None:
        def need_k(tm_, tn_):
            return (2 * tm_ * tk_eff * xsz
                    + 2 * tm_ * tn_ * osz
                    + 2 * (tk_eff + 1) * tn_ * wsz
                    + tm_ * tn_ * 4)               # f32 accumulator scratch

        while need_k(tm_eff, tn_eff) > budget and tm_eff > sub:
            tm_eff = max(sub, _round_up(tm_eff // 2, sub))
        while need_k(tm_eff, tn_eff) > budget and tn_eff > 256:
            tn_eff = max(256, _round_up(tn_eff // 2, 256))
        tm_eff = _balance_grid_m(m, tm_eff, sub)

        gm, gn, gk = _cdiv(m, tm_eff), _cdiv(out_f, tn_eff), in_f // tk_eff
        cost = pl.CostEstimate(
            flops=2 * m * in_f * out_f,
            transcendentals=0,
            bytes_accessed=(gn * m * in_f * xsz + gm * in_f * out_f * wsz
                            + out_f * wsz + m * out_f * osz))
        return pl.pallas_call(
            _linear_k_kernel,
            out_shape=jax.ShapeDtypeStruct((m, out_f), x2.dtype),
            grid_spec=pltpu.PrefetchScalarGridSpec(
                num_scalar_prefetch=0,
                grid=(gm, gn, gk),
                in_specs=[
                    pl.BlockSpec((tm_eff, tk_eff), lambda i, j, k: (i, k)),
                    pl.BlockSpec((tk_eff, tn_eff), lambda i, j, k: (k, j)),
                    pl.BlockSpec((1, tn_eff), lambda i, j, k: (0, j)),
                ],
                out_specs=pl.BlockSpec((tm_eff, tn_eff), lambda i, j, k: (i, j)),
                scratch_shapes=[pltpu.VMEM((tm_eff, tn_eff), jnp.float32)],
            ),
            compiler_params=pltpu.CompilerParams(
                dimension_semantics=("parallel", "parallel", "arbitrary"),
                vmem_limit_bytes=_vmem_limit(need_k(tm_eff, tn_eff), limit_cap)),
            cost_estimate=cost,
        )(x2, w, b)

    # --- untiled K ------------------------------------------------------------
    while need_untiled(tm_eff, tn_eff) > budget and tm_eff > sub:
        tm_eff = max(sub, _round_up(tm_eff // 2, sub))
    while need_untiled(tm_eff, tn_eff) > budget and tn_eff > 256:
        tn_eff = max(256, _round_up(tn_eff // 2, 256))
    while need_untiled(tm_eff, tn_eff) > budget and tn_eff > 128:
        tn_eff = max(128, _round_up(tn_eff // 2, 128))
    tm_eff = _balance_grid_m(m, tm_eff, sub)

    gm, gn = _cdiv(m, tm_eff), _cdiv(out_f, tn_eff)
    x_bytes = m * in_f * xsz
    w_bytes = in_f * out_f * wsz

    # Grid order that minimises HBM re-streaming:
    #   N innermost -> x tile resident per M block, W re-fetched gm times
    #   M innermost -> W tile resident per N block, x re-fetched gn times
    m_inner = (gn * x_bytes + w_bytes) < (x_bytes + gm * w_bytes)
    if m_inner:
        grid = (gn, gm)
        x_map = lambda j, i: (i, 0)
        w_map = lambda j, i: (0, j)
        o_map = lambda j, i: (i, j)
        streamed = gn * x_bytes + w_bytes
    else:
        grid = (gm, gn)
        x_map = lambda i, j: (i, 0)
        w_map = lambda i, j: (0, j)
        o_map = lambda i, j: (i, j)
        streamed = x_bytes + gm * w_bytes

    cost = pl.CostEstimate(
        flops=2 * m * in_f * out_f,
        transcendentals=0,
        bytes_accessed=streamed + out_f * wsz + m * out_f * osz)
    return pl.pallas_call(
        _linear_kernel,
        out_shape=jax.ShapeDtypeStruct((m, out_f), x2.dtype),
        grid_spec=pltpu.PrefetchScalarGridSpec(
            num_scalar_prefetch=0,
            grid=grid,
            in_specs=[
                pl.BlockSpec((tm_eff, in_f), x_map),
                pl.BlockSpec((in_f, tn_eff), w_map),
                pl.BlockSpec((1, tn_eff), w_map),
            ],
            out_specs=pl.BlockSpec((tm_eff, tn_eff), o_map),
        ),
        compiler_params=pltpu.CompilerParams(
            dimension_semantics=("parallel", "parallel"),
            vmem_limit_bytes=_vmem_limit(need_untiled(tm_eff, tn_eff),
                                         limit_cap)),
        cost_estimate=cost,
    )(x2, w, b)


# ---------------------------------------------------------------------------
# public wrapper
# ---------------------------------------------------------------------------
@functools.partial(jax.jit, static_argnames=("tm", "tn", "tk"))
def low_rank_linear(x, params, tm=512, tn=512, tk=None):
    """Apply LowRankLinear.

    params:
      single Linear : {"w": (in, out), "b": (out,)}
      low-rank      : {"w1": (in, rank), "b1": (rank,),
                       "w2": (rank, out), "b2": (out,)}
    """
    *lead, in_f = x.shape
    m = 1
    for d in lead:
        m *= d
    x2 = x.reshape(m, in_f)

    if "w1" in params:
        y = _low_rank_matmul(x2, params, tm, tn)
    else:
        y = _linear_matmul(x2, params, tm, tn, tk)

    out_f = y.shape[-1]
    return y.reshape(*lead, out_f)


# ---------------------------------------------------------------------------
# Deterministic parameter init (mimics nn.Linear's uniform(-1/sqrt(fan_in), ..))
# ---------------------------------------------------------------------------
def init_low_rank_linear(key, in_features, out_features, rank_features=None,
                         dtype=jnp.float32):
    def linear_params(k, fan_in, fan_out):
        kw, kb = jax.random.split(k)
        bound = 1.0 / jnp.sqrt(fan_in)
        # stored as (in, out) == PyTorch weight (out, in) pre-transposed
        w = jax.random.uniform(kw, (fan_in, fan_out), dtype, -bound, bound)
        b = jax.random.uniform(kb, (fan_out,), dtype, -bound, bound)
        return w, b

    if rank_features is None:
        w, b = linear_params(key, in_features, out_features)
        return {"w": w, "b": b}
    k1, k2 = jax.random.split(key)
    w1, b1 = linear_params(k1, in_features, rank_features)
    w2, b2 = linear_params(k2, rank_features, out_features)
    return {"w1": w1, "b1": b1, "w2": w2, "b2": b2}


# ---------------------------------------------------------------------------
# Demo / correctness check
# ---------------------------------------------------------------------------
if __name__ == "__main__":
    key = jax.random.PRNGKey(0)
    kx, kp1, kp2, kx2, kp3 = jax.random.split(key, 5)

    # (1) low-rank path; seq=9 -> m=18 exercises the ragged last M block
    #     (padded reads, masked writes).
    batch, seq, in_f, rank, out_f = 2, 9, 32, 16, 64
    x = jax.random.normal(kx, (batch, seq, in_f), jnp.float32)
    params_lr = init_low_rank_linear(kp1, in_f, out_f, rank_features=rank)
    y_lr = low_rank_linear(x, params_lr)
    jax.block_until_ready(y_lr)
    ref_lr = (x @ params_lr["w1"] + params_lr["b1"]) @ params_lr["w2"] + params_lr["b2"]
    assert y_lr.shape == (batch, seq, out_f)
    assert jnp.allclose(y_lr, ref_lr, atol=1e-4, rtol=1e-4)

    # (2) full-rank path (rank_features is None), single fused-dot kernel.
    params_full = init_low_rank_linear(kp2, in_f, out_f, rank_features=None)
    y_full = low_rank_linear(x, params_full)
    jax.block_until_ready(y_full)
    ref_full = x @ params_full["w"] + params_full["b"]
    assert y_full.shape == (batch, seq, out_f)
    assert jnp.allclose(y_full, ref_full, atol=1e-4, rtol=1e-4)

    # (3) full-rank path exercising the K-tiled accumulator kernel (gK = 2).
    in_f2, out_f2 = 256, 128
    x_big = jax.random.normal(kx2, (batch, seq, in_f2), jnp.float32)
    params_k = init_low_rank_linear(kp3, in_f2, out_f2, rank_features=None)
    y_k = low_rank_linear(x_big, params_k, tk=128)
    jax.block_until_ready(y_k)
    ref_k = x_big @ params_k["w"] + params_k["b"]
    assert y_k.shape == (batch, seq, out_f2)
    assert jnp.allclose(y_k, ref_k, atol=1e-4, rtol=1e-4)

    print("KERNEL_OK")
</pallas_src>

<mosaic_0001>
module attributes {stable_mosaic.version = 11 : i64} {
  func.func @_lowrank_fused_kernel(%arg0: i32, %arg1: memref<24x32xf32, #tpu.memory_space<vmem>>, %arg2: memref<32x16xf32, #tpu.memory_space<vmem>>, %arg3: memref<1x16xf32, #tpu.memory_space<vmem>>, %arg4: memref<16x64xf32, #tpu.memory_space<vmem>>, %arg5: memref<1x64xf32, #tpu.memory_space<vmem>>, %arg6: memref<24x64xf32, #tpu.memory_space<vmem>>) attributes {dimension_semantics = [#tpu.dimension_semantics<parallel>], iteration_bounds = array<i64: 1>, scalar_prefetch = 0 : i64, scratch_operands = 0 : i64, tpu.core_type = #tpu.core_type<tc>, window_params = [{transform_indices = @transform_0, window_bounds = array<i64: 24, 32>}, {pipeline_mode = #tpu.pipeline_mode<synchronous>, transform_indices = @transform_1, window_bounds = array<i64: 32, 16>}, {pipeline_mode = #tpu.pipeline_mode<synchronous>, transform_indices = @transform_2, window_bounds = array<i64: 1, 16>}, {pipeline_mode = #tpu.pipeline_mode<synchronous>, transform_indices = @transform_3, window_bounds = array<i64: 16, 64>}, {pipeline_mode = #tpu.pipeline_mode<synchronous>, transform_indices = @transform_4, window_bounds = array<i64: 1, 64>}, {transform_indices = @transform_5, window_bounds = array<i64: 24, 64>}]} {
    %c0 = arith.constant 0 : index
    %c0_0 = arith.constant 0 : index
    %0 = vector.load %arg1[%c0, %c0_0] : memref<24x32xf32, #tpu.memory_space<vmem>>, vector<24x32xf32>
    %c0_1 = arith.constant 0 : index
    %c0_2 = arith.constant 0 : index
    %1 = vector.load %arg2[%c0_1, %c0_2] : memref<32x16xf32, #tpu.memory_space<vmem>>, vector<32x16xf32>
    %cst = arith.constant dense<0.000000e+00> : vector<24x16xf32>
    %2 = tpu.matmul %0, %1, %cst {dimension_numbers = #tpu.dot_dimension_numbers<[1], [0], [0], [1], [0, 0, 1, 1], [], []>} : vector<24x32xf32>, vector<32x16xf32>, vector<24x16xf32> -> vector<24x16xf32>
    %c0_3 = arith.constant 0 : index
    %c0_4 = arith.constant 0 : index
    %3 = vector.load %arg3[%c0_3, %c0_4] : memref<1x16xf32, #tpu.memory_space<vmem>>, vector<1x16xf32>
    %4 = vector.broadcast %3 : vector<1x16xf32> to vector<24x16xf32>
    %5 = arith.addf %2, %4 : vector<24x16xf32>
    %c0_5 = arith.constant 0 : index
    %c0_6 = arith.constant 0 : index
    %6 = vector.load %arg4[%c0_5, %c0_6] : memref<16x64xf32, #tpu.memory_space<vmem>>, vector<16x64xf32>
    %cst_7 = arith.constant dense<0.000000e+00> : vector<24x64xf32>
    %7 = tpu.matmul %5, %6, %cst_7 {dimension_numbers = #tpu.dot_dimension_numbers<[1], [0], [0], [1], [0, 0, 1, 1], [], []>} : vector<24x16xf32>, vector<16x64xf32>, vector<24x64xf32> -> vector<24x64xf32>
    %c0_8 = arith.constant 0 : index
    %c0_9 = arith.constant 0 : index
    %8 = vector.load %arg5[%c0_8, %c0_9] : memref<1x64xf32, #tpu.memory_space<vmem>>, vector<1x64xf32>
    %9 = vector.broadcast %8 : vector<1x64xf32> to vector<24x64xf32>
    %10 = arith.addf %7, %9 : vector<24x64xf32>
    %c0_10 = arith.constant 0 : index
    %c0_11 = arith.constant 0 : index
    %11 = vector.load %arg6[%c0_10, %c0_11] : memref<24x64xf32, #tpu.memory_space<vmem>>, vector<24x64xf32>
    tpu.vector_store %arg6[%c0_10, %c0_11], %10 {strides = array<i32>} : memref<24x64xf32, #tpu.memory_space<vmem>>, vector<24x64xf32>,
    return
  }
  func.func @transform_0(%arg0: i32) -> (i32, i32) {
    %c0_i32 = arith.constant 0 : i32
    %c0_i32_0 = arith.constant 0 : i32
    return %arg0, %c0_i32 : i32, i32
  }
  func.func @transform_1(%arg0: i32) -> (i32, i32) {
    %c0_i32 = arith.constant 0 : i32
    %c0_i32_0 = arith.constant 0 : i32
    %c0_i32_1 = arith.constant 0 : i32
    return %c0_i32, %c0_i32_0 : i32, i32
  }
  func.func @transform_2(%arg0: i32) -> (i32, i32) {
    %c0_i32 = arith.constant 0 : i32
    %c0_i32_0 = arith.constant 0 : i32
    %c0_i32_1 = arith.constant 0 : i32
    return %c0_i32, %c0_i32_0 : i32, i32
  }
  func.func @transform_3(%arg0: i32) -> (i32, i32) {
    %c0_i32 = arith.constant 0 : i32
    %c0_i32_0 = arith.constant 0 : i32
    %c0_i32_1 = arith.constant 0 : i32
    return %c0_i32, %c0_i32_0 : i32, i32
  }
  func.func @transform_4(%arg0: i32) -> (i32, i32) {
    %c0_i32 = arith.constant 0 : i32
    %c0_i32_0 = arith.constant 0 : i32
    %c0_i32_1 = arith.constant 0 : i32
    return %c0_i32, %c0_i32_0 : i32, i32
  }
  func.func @transform_5(%arg0: i32) -> (i32, i32) {
    %c0_i32 = arith.constant 0 : i32
    %c0_i32_0 = arith.constant 0 : i32
    return %arg0, %c0_i32 : i32, i32
  }
}

</mosaic_0001>

<llo_original>
// kernel: low_rank_linear.1
$region0: #{low_rank_linear.1}
  #allocation0 [shape = 'u32[]', space=smem, size = 0x4, offset = 0x4, fixed_abs, tag = 'smem constant byte address 0x4 - core index']
  #allocation1 [shape = 'u32[144,128]{1,0:T(1,128)}', space=vmem, size = 0x12000, scoped, tag = 'internal scratch']
  %s0 = inlined_call_operand.vmem [shape: f32[18,32], index: 0, kind: input, shape index: {}]
  %s1 = inlined_call_operand.vmem [shape: f32[32,16], index: 1, kind: input, shape index: {}]
  %s2 = inlined_call_operand.vmem [shape: f32[1,16], index: 2, kind: input, shape index: {}]
  %s3 = inlined_call_operand.vmem [shape: f32[16,64], index: 3, kind: input, shape index: {}]
  %s4 = inlined_call_operand.vmem [shape: f32[1,64], index: 4, kind: input, shape index: {}]
  %s5 = inlined_call_operand.vmem [shape: f32[18,64], index: 5, kind: output, shape index: {}]
  %s6 = sld [smem:[#allocation0]]
  $region30: #{low_rank_linear.1} parent=0
    _
  %s8 = ssub.s32 1, %s6
  %s9 = scalar_select 0, %s8, %s6
  // Predicated region
  $region2: #{low_rank_linear.1} parent=0 // pred_check
    _
  $region3: #{low_rank_linear.1} parent=0 // pred_check_branch
    %11 = sbr.rel (0) target = $region5
  $region4: #{low_rank_linear.1} parent=0 // pred_region
    _
  $region5: #{low_rank_linear.1} parent=0 // pred_fallthru
    _
  // Predicated region
  $region6: #{low_rank_linear.1} parent=0 // pred_check
    _
  $region7: #{low_rank_linear.1} parent=0 // pred_check_branch
    %13 = sbr.rel (0) target = $region9
  $region8: #{low_rank_linear.1} parent=0 // pred_region
    _
  $region9: #{low_rank_linear.1} parent=0 // pred_fallthru
    _
  // Predicated region
  $region10: #{low_rank_linear.1} parent=0 // pred_check
    _
  $region11: #{low_rank_linear.1} parent=0 // pred_check_branch
    %15 = sbr.rel (0) target = $region13
  $region12: #{low_rank_linear.1} parent=0 // pred_region
    _
  $region13: #{low_rank_linear.1} parent=0 // pred_fallthru
    _
  // Predicated region
  $region14: #{low_rank_linear.1} parent=0 // pred_check
    _
  $region15: #{low_rank_linear.1} parent=0 // pred_check_branch
    %17 = sbr.rel (0) target = $region17
  $region16: #{low_rank_linear.1} parent=0 // pred_region
    _
  $region17: #{low_rank_linear.1} parent=0 // pred_fallthru
    _
  // Predicated region
  $region18: #{low_rank_linear.1} parent=0 // pred_check
    _
  $region19: #{low_rank_linear.1} parent=0 // pred_check_branch
    %19 = sbr.rel (0) target = $region21
  $region20: #{low_rank_linear.1} parent=0 // pred_region
    _
  $region21: #{low_rank_linear.1} parent=0 // pred_fallthru
    _
  %v20 = vld [vmem:[%s0] sm:$0xff]
  %v21 = vld [vmem:[%s0 + $0x8] sm:$0xff]
  %v22 = vld [vmem:[%s0 + $0x10] sm:$0xff]
  %v23 = vld [vmem:[%s1] sm:$0xff]
  %v24 = vld [vmem:[%s1 + $0x8] sm:$0xff]
  %v25 = vld [vmem:[%s1 + $0x10] sm:$0xff]
  %v26 = vld [vmem:[%s1 + $0x18] sm:$0xff]
  %v27 = vld [vmem:[%s2] sm:$0x1]
  %v29 = vlaneseq
  %v30 = vshrl.u32 %v29, 7
  %v31 = vsub.s32 0, %v30
  %v32 = vrot.slane %v27, %v31
  %vm34 = vcmask 261120
  %v36 = vsel %vm34, %v20, 0
  %v39 = vsel %vm34, %v21, 0
  %v42 = vsel %vm34, %v22, 0
  %44 = vmatprep.subr.mxu0 0.0
  %45 = vmatpush1.msra.mxu0 %v23
  %46 = vmatprep.subr.mxu0 0.0
  %47 = vmatpush1.msra.mxu0 %v24
  %48 = vmatprep.subr.mxu0 0.0
  %49 = vmatpush1.msra.mxu0 %v25
  %50 = vmatprep.subr.mxu0 0.0
  %51 = vmatpush1.msra.mxu0 %v26
  %52 = vmatprep.subr.mxu0 0.0
  %53 = vmatpush1.msra.mxu0 0.0
  %54 = vmatprep.subr.mxu0 0.0
  %55 = vmatpush1.msra.mxu0 0.0
  %56 = vmatprep.subr.mxu0 0.0
  %57 = vmatpush1.msra.mxu0 0.0
  %58 = vmatprep.subr.mxu0 0.0
  %59 = vmatpush1.msra.mxu0 0.0
  %60 = vmatprep.subr.mxu0 0.0
  %61 = vmatpush1.msra.mxu0 0.0
  %62 = vmatprep.subr.mxu0 0.0
  %63 = vmatpush1.msra.mxu0 0.0
  %64 = vmatprep.subr.mxu0 0.0
  %65 = vmatpush1.msra.mxu0 0.0
  %66 = vmatprep.subr.mxu0 0.0
  %67 = vmatpush1.msra.mxu0 0.0
  %68 = vmatprep.subr.mxu0 0.0
  %69 = vmatpush1.msra.mxu0 0.0
  %70 = vmatprep.subr.mxu0 0.0
  %71 = vmatpush1.msra.mxu0 0.0
  %72 = vmatprep.subr.mxu0 0.0
  %73 = vmatpush1.msra.mxu0 0.0
  %74 = vmatprep.subr.mxu0 0.0
  %75 = vmatpush1.msra.mxu0 0.0
  %76 = vmatprep.subr.mxu0 0.0
  %77 = vmatpush1.msra.mxu0 0.0
  %78 = vmatprep.subr.mxu0 0.0
  %79 = vmatpush1.msra.mxu0 0.0
  %80 = vmatprep.subr.mxu0 0.0
  %81 = vmatpush1.msra.mxu0 0.0
  %82 = vmatprep.subr.mxu0 0.0
  %83 = vmatpush1.msra.mxu0 0.0
  %84 = vmatprep.subr.mxu0 0.0
  %85 = vmatpush1.msra.mxu0 0.0
  %86 = vmatprep.subr.mxu0 0.0
  %87 = vmatpush1.msra.mxu0 0.0
  %88 = vmatprep.subr.mxu0 0.0
  %89 = vmatpush1.msra.mxu0 0.0
  %90 = vmatprep.subr.mxu0 0.0
  %91 = vmatpush1.msra.mxu0 0.0
  %92 = vmatprep.subr.mxu0 0.0
  %93 = vmatpush1.msra.mxu0 0.0
  %94 = vmatprep.subr.mxu0 0.0
  %95 = vmatpush1.msra.mxu0 0.0
  %96 = vmatprep.subr.mxu0 0.0
  %97 = vmatpush1.msra.mxu0 0.0
  %98 = vmatprep.subr.mxu0 0.0
  %99 = vmatpush1.msra.mxu0 0.0
  %100 = vmatprep.subr.mxu0 0.0
  %101 = vmatpush1.msra.mxu0 0.0
  %102 = vmatprep.subr.mxu0 0.0
  %103 = vmatpush1.msra.mxu0 0.0
  %104 = vmatprep.subr.mxu0 0.0
  %105 = vmatpush1.msra.mxu0 0.0
  %106 = vmatprep.subr.mxu0 0.0
  %107 = vmatpush1.msra.mxu0 0.0
  %108 = vmatprep.mubr.f32.mxu0 0.0
  %109 = vmatmul.mubr.f32.gmra.mrb[0].mxu0 %v36
  %v110 = vpop.f32.mrb[0].mxu0
  %v111 = vadd.f32 %v32, %v110
  %v112 = vpop.f32.mrb[0].mxu0
  %113 = vmatprep.mubr.f32.mxu0 0.0
  %114 = vmatmul.mubr.f32.gmra.mrb[0].mxu0 %v39
  %v115 = vpop.f32.mrb[0].mxu0
  %v116 = vadd.f32 %v32, %v115
  %v117 = vpop.f32.mrb[0].mxu0
  %118 = vmatprep.mubr.f32.mxu0 0.0
  %119 = vmatmul.mubr.f32.gmra.mrb[0].mxu0 %v42
  %v120 = vpop.f32.mrb[0].mxu0
  %v121 = vadd.f32 %v32, %v120
  %v122 = vpop.f32.mrb[0].mxu0
  %123 = vdwg.mxu0
  %v124 = vld [vmem:[%s3] sm:$0xff]
  %v125 = vld [vmem:[%s3 + $0x8] sm:$0xff]
  %v126 = vld [vmem:[%s4] sm:$0x1]
  %v128 = vlaneseq
  %v129 = vshrl.u32 %v128, 7
  %v130 = vsub.s32 0, %v129
  %v131 = vrot.slane %v126, %v130
  %vm133 = vcmask 130048
  %v135 = vsel %vm133, %v111, 0
  %v138 = vsel %vm133, %v116, 0
  %v141 = vsel %vm133, %v121, 0
  %143 = vmatprep.subr.mxu0 0.0
  %144 = vmatpush1.msra.mxu0 %v124
  %145 = vmatprep.subr.mxu0 0.0
  %146 = vmatpush1.msra.mxu0 %v125
  %147 = vmatprep.subr.mxu0 0.0
  %148 = vmatpush1.msra.mxu0 0.0
  %149 = vmatprep.subr.mxu0 0.0
  %150 = vmatpush1.msra.mxu0 0.0
  %151 = vmatprep.subr.mxu0 0.0
  %152 = vmatpush1.msra.mxu0 0.0
  %153 = vmatprep.subr.mxu0 0.0
  %154 = vmatpush1.msra.mxu0 0.0
  %155 = vmatprep.subr.mxu0 0.0
  %156 = vmatpush1.msra.mxu0 0.0
  %157 = vmatprep.subr.mxu0 0.0
  %158 = vmatpush1.msra.mxu0 0.0
  %159 = vmatprep.subr.mxu0 0.0
  %160 = vmatpush1.msra.mxu0 0.0
  %161 = vmatprep.subr.mxu0 0.0
  %162 = vmatpush1.msra.mxu0 0.0
  %163 = vmatprep.subr.mxu0 0.0
  %164 = vmatpush1.msra.mxu0 0.0
  %165 = vmatprep.subr.mxu0 0.0
  %166 = vmatpush1.msra.mxu0 0.0
  %167 = vmatprep.subr.mxu0 0.0
  %168 = vmatpush1.msra.mxu0 0.0
  %169 = vmatprep.subr.mxu0 0.0
  %170 = vmatpush1.msra.mxu0 0.0
  %171 = vmatprep.subr.mxu0 0.0
  %172 = vmatpush1.msra.mxu0 0.0
  %173 = vmatprep.subr.mxu0 0.0
  %174 = vmatpush1.msra.mxu0 0.0
  %175 = vmatprep.subr.mxu0 0.0
  %176 = vmatpush1.msra.mxu0 0.0
  %177 = vmatprep.subr.mxu0 0.0
  %178 = vmatpush1.msra.mxu0 0.0
  %179 = vmatprep.subr.mxu0 0.0
  %180 = vmatpush1.msra.mxu0 0.0
  %181 = vmatprep.subr.mxu0 0.0
  %182 = vmatpush1.msra.mxu0 0.0
  %183 = vmatprep.subr.mxu0 0.0
  %184 = vmatpush1.msra.mxu0 0.0
  %185 = vmatprep.subr.mxu0 0.0
  %186 = vmatpush1.msra.mxu0 0.0
  %187 = vmatprep.subr.mxu0 0.0
  %188 = vmatpush1.msra.mxu0 0.0
  %189 = vmatprep.subr.mxu0 0.0
  %190 = vmatpush1.msra.mxu0 0.0
  %191 = vmatprep.subr.mxu0 0.0
  %192 = vmatpush1.msra.mxu0 0.0
  %193 = vmatprep.subr.mxu0 0.0
  %194 = vmatpush1.msra.mxu0 0.0
  %195 = vmatprep.subr.mxu0 0.0
  %196 = vmatpush1.msra.mxu0 0.0
  %197 = vmatprep.subr.mxu0 0.0
  %198 = vmatpush1.msra.mxu0 0.0
  %199 = vmatprep.subr.mxu0 0.0
  %200 = vmatpush1.msra.mxu0 0.0
  %201 = vmatprep.subr.mxu0 0.0
  %202 = vmatpush1.msra.mxu0 0.0
  %203 = vmatprep.subr.mxu0 0.0
  %204 = vmatpush1.msra.mxu0 0.0
  %205 = vmatprep.subr.mxu0 0.0
  %206 = vmatpush1.msra.mxu0 0.0
  %207 = vmatprep.mubr.f32.mxu0 0.0
  %208 = vmatmul.mubr.f32.gmra.mrb[0].mxu0 %v135
  %v209 = vpop.f32.mrb[0].mxu0
  %v210 = vadd.f32 %v131, %v209
  %v211 = vpop.f32.mrb[0].mxu0
  %212 = vmatprep.mubr.f32.mxu0 0.0
  %213 = vmatmul.mubr.f32.gmra.mrb[0].mxu0 %v138
  %v214 = vpop.f32.mrb[0].mxu0
  %v215 = vadd.f32 %v131, %v214
  %v216 = vpop.f32.mrb[0].mxu0
  %217 = vmatprep.mubr.f32.mxu0 0.0
  %218 = vmatmul.mubr.f32.gmra.mrb[0].mxu0 %v141
  %v219 = vpop.f32.mrb[0].mxu0
  %v220 = vadd.f32 %v131, %v219
  %v221 = vpop.f32.mrb[0].mxu0
  %222 = vdwg.mxu0
  %vm223 = vcmask 523264
  %224 = vst.msk [vmem:[%s5] sm:$0xff] %vm223, %v210
  %225 = vst.msk [vmem:[%s5 + $0x8] sm:$0xff] %vm223, %v215
  %226 = vst.msk [vmem:[%s5 + $0x10] sm:$0xff] %vm223, %v220
  // Predicated region
  $region22: #{low_rank_linear.1} parent=0 // pred_check
    _
  $region23: #{low_rank_linear.1} parent=0 // pred_check_branch
    %228 = sbr.rel (0) target = $region25
  $region24: #{low_rank_linear.1} parent=0 // pred_region
    _
  $region25: #{low_rank_linear.1} parent=0 // pred_fallthru
    _
  // Predicated region
  $region26: #{low_rank_linear.1} parent=0 // pred_check
    _
  $region27: #{low_rank_linear.1} parent=0 // pred_check_branch
    %230 = sbr.rel (0) target = $region29
  $region28: #{low_rank_linear.1} parent=0 // pred_region
    _
  $region29: #{low_rank_linear.1} parent=0 // pred_fallthru
    _

</llo_original>
